<compile_context>
chip_gen: v5e
topology: v5e:2x2
jax: 0.10.0
libtpu: 0.0.40
codegen_flags: <defaults>
</compile_context>

<pallas_src>
import math
import numpy as np
import jax
import jax.numpy as jnp
from jax.experimental import pallas as pl
from jax.experimental.pallas import tpu as pltpu

LANE = 128


def _round_up(x, m):
    return ((x + m - 1) // m) * m


# ------------------------------------------------------------------ host-side graph utilities
def add_self_loops(num_nodes, indices, edge_types, start=0):
    """Mirror of Graph.add_self_loops."""
    loops = np.arange(start, num_nodes, dtype=np.int64)
    ind_pre = np.stack([loops, loops])
    et_pre = np.ones(loops.shape[0], dtype=np.int64)
    indices = np.concatenate([ind_pre, indices], axis=-1)
    edge_types = np.concatenate([et_pre, edge_types + 1], axis=-1)
    return indices, edge_types


def expand_edges(indices, edge_types, target_dim, source_dim):
    """Mirror of Graph.expand: flattened (target, source, edge_type) triples."""
    t_ind = np.arange(target_dim, dtype=np.int64)[None, :, None]
    s_ind = np.arange(source_dim, dtype=np.int64)[None, None, :]
    tgt = indices[0][:, None, None] * target_dim + t_ind            # (E, T, 1)
    src = indices[1][:, None, None] * source_dim + s_ind            # (E, 1, S)
    typ = ((edge_types[:, None, None] - 1) * target_dim + t_ind) * source_dim + s_ind + 1
    shape = typ.shape
    tgt = np.broadcast_to(tgt, shape).reshape(-1)
    src = np.broadcast_to(src, shape).reshape(-1)
    typ = typ.reshape(-1)
    return tgt, src, typ


def dense_layer_params(num_nodes, indices, edge_types, in_f, out_f, wvec, bvec):
    """Densify one GraphConvLayer into lane-padded params.

    Returns:
      Wt : (Dp_in, Dp_out) bf16 -- transpose of dense sparse_matrix(weight_vector), zero-padded
      b  : (1, Dp_out)     f32  -- row-sums of dense bias matrix (== bias_mat @ ones), padded
      D_in, D_out : unpadded logical dims (N*in_f, N*out_f)
    """
    tgt, src, typ = expand_edges(indices, edge_types, out_f, in_f)
    W = np.zeros((num_nodes * out_f, num_nodes * in_f), dtype=np.float32)
    np.add.at(W, (tgt, src), np.asarray(wvec, np.float32)[typ - 1])   # COO duplicates sum

    btgt, _, btyp = expand_edges(indices, edge_types, out_f, 1)
    b = np.zeros((num_nodes * out_f,), dtype=np.float32)
    np.add.at(b, btgt, np.asarray(bvec, np.float32)[btyp - 1])

    D_in, D_out = num_nodes * in_f, num_nodes * out_f
    Dp_in, Dp_out = _round_up(D_in, LANE), _round_up(D_out, LANE)
    Wt_p = np.zeros((Dp_in, Dp_out), np.float32)
    Wt_p[:D_in, :D_out] = W.T
    b_p = np.zeros((1, Dp_out), np.float32)
    b_p[0, :D_out] = b
    return (jnp.asarray(Wt_p, jnp.bfloat16), jnp.asarray(b_p, jnp.float32), D_in, D_out)


# --------------------------------------------------------------------------------- kernel
def make_gcn_kernel(num_layers):
    def kernel(x_ref, *refs):
        # refs = (W1t, b1, W2t, b2, ..., out)
        out_ref = refs[-1]
        params = refs[:-1]
        h = x_ref[...]                                   # bf16 (TB, Dp_in)
        for l in range(num_layers):
            wt = params[2 * l][...]                      # bf16 (Dp_in_l, Dp_out_l), resident
            b = params[2 * l + 1][...]                   # f32  (1, Dp_out_l)
            # bf16 MXU matmul, f32 accumulation; bias add in f32.
            acc = jnp.dot(h, wt, preferred_element_type=jnp.float32) + b
            if l + 1 < num_layers:
                # ReLU in f32 (no bf16 VPU on v5e), cast to bf16 only for the next matmul.
                h = jnp.maximum(acc, 0.0).astype(jnp.bfloat16)
            else:
                out_ref[...] = acc.astype(out_ref.dtype)
    return kernel


# --------------------------------------------------------------------------------- wrapper
def _pick_batch_tile(B):
    # MXU-native row counts (256 on v6e/v7x, 128 on v5e); capped at 512 for v7x's 64 MiB VMEM.
    if B >= 2048:
        return 512
    if B >= 512:
        return 256
    if B >= 256:
        return 128
    if B >= 128:
        return 64
    if B >= 64:
        return 32
    return 16   # tiny batches: pad up (bf16 sublane-friendly)


def _vmem_limit_bytes():
    # Raise the scoped-VMEM ceiling (defaults 16/32/32 MiB on v5e/v6e/v7x), stay under physical.
    try:
        cap = int(pltpu.get_tpu_info().vmem_capacity_bytes)
    except Exception:
        cap = 64 << 20          # conservative (v7x physical)
    return int(min(cap * 3 // 4, 100 << 20))


def graph_conv_net_forward(inp, layer_params, num_nodes):
    """inp: (..., N, f0) float; layer_params: list of (W^T bf16, bias f32, D_in, D_out)."""
    in_shape = inp.shape
    B = int(np.prod(in_shape[:-2], dtype=np.int64))
    D_in = int(in_shape[-2] * in_shape[-1])
    num_layers = len(layer_params)
    Dp_in = int(layer_params[0][0].shape[0])
    Dp_out = int(layer_params[-1][0].shape[1])
    D_out_last = int(layer_params[-1][3])

    # Resident-weight VMEM budget check (single-buffered bf16 W + f32 b).
    resident = sum(int(Wt.size) * Wt.dtype.itemsize + int(b.size) * b.dtype.itemsize
                   for Wt, b, _, _ in layer_params)
    if resident > (40 << 20):
        # TODO(synk): per-layer / K-tiled or block-sparse scalar-prefetch kernel for weight
        #             sets that do not fit v7x's 64 MiB VMEM.
        raise ValueError(f"resident dense weights ({resident} bytes) exceed VMEM budget")

    TB = _pick_batch_tile(B)
    B_pad = max(int(pl.cdiv(B, TB)), 2) * TB       # >= 2 grid steps -> both v7x TCs busy
    grid = (B_pad // TB,)

    x = jnp.asarray(inp, jnp.float32).reshape(B, D_in)     # == input.view(batch, N*f0)
    x_pad = jnp.zeros((B_pad, Dp_in), jnp.bfloat16).at[:B, :D_in].set(x.astype(jnp.bfloat16))

    flat_params = []
    for Wt, b, _, _ in layer_params:
        flat_params += [Wt, b]

    flops = 2 * B_pad * sum(int(Wt.shape[0]) * int(Wt.shape[1]) for Wt, _, _, _ in layer_params)
    bytes_accessed = int(x_pad.size) * 2 + B_pad * Dp_out * 4 + resident
    cost = pl.CostEstimate(flops=flops, transcendentals=0, bytes_accessed=int(bytes_accessed))

    def _call(single_buffer_weights):
        def const_spec(shape):
            # Constant index_map: block never changes across grid steps.
            if single_buffer_weights:
                return pl.BlockSpec(shape, lambda i: (0, 0), pipeline_mode=pl.Buffered(1))
            return pl.BlockSpec(shape, lambda i: (0, 0))

        in_specs = [pl.BlockSpec((TB, Dp_in), lambda i: (i, 0))]     # streamed batch tiles
        for Wt, b, _, _ in layer_params:
            in_specs.append(const_spec(Wt.shape))                    # VMEM-resident weights
            in_specs.append(const_spec(b.shape))

        return pl.pallas_call(
            make_gcn_kernel(num_layers),
            out_shape=jax.ShapeDtypeStruct((B_pad, Dp_out), jnp.float32),
            grid_spec=pltpu.PrefetchScalarGridSpec(
                num_scalar_prefetch=0,
                grid=grid,
                in_specs=in_specs,
                out_specs=pl.BlockSpec((TB, Dp_out), lambda i: (i, 0)),
            ),
            compiler_params=pltpu.CompilerParams(
                dimension_semantics=("parallel",),                   # 2-TC sharding on v7x
                vmem_limit_bytes=_vmem_limit_bytes(),
            ),
            cost_estimate=cost,
        )(x_pad, *flat_params)

    try:
        out = _call(True)      # single-buffered resident weights (saves VMEM on v7x)
    except Exception:
        out = _call(False)     # fallback: default double-buffering

    f_last = D_out_last // num_nodes
    return out[:B, :D_out_last].reshape(in_shape[:-1] + (f_last,))


# --------------------------------------------------------------------------------- reference
def reference_forward(inp, layers_data, num_nodes):
    """Pure numpy per-edge mirror of the PyTorch forward (sparse.mm accumulation, f32)."""
    in_shape = inp.shape
    B = int(np.prod(in_shape[:-2], dtype=np.int64))
    x = np.asarray(inp, np.float32).reshape(B, -1).T     # (D, B) == input.view(...).T
    out_f = None
    for l, (ind, et, in_f, out_f, wvec, bvec) in enumerate(layers_data):
        if l > 0:
            x = np.maximum(x, 0.0)
        y = np.zeros((num_nodes * out_f, B), np.float32)
        for e in range(ind.shape[1]):
            i, j, t = int(ind[0, e]), int(ind[1, e]), int(et[e])
            Wblk = wvec[(t - 1) * out_f * in_f: t * out_f * in_f].reshape(out_f, in_f)
            y[i * out_f:(i + 1) * out_f, :] += Wblk @ x[j * in_f:(j + 1) * in_f, :]
            bblk = bvec[(t - 1) * out_f: t * out_f]
            y[i * out_f:(i + 1) * out_f, :] += bblk[:, None]
        x = y
    return x.T.reshape(in_shape[:-1] + (out_f,))


# --------------------------------------------------------------------------------- main
if __name__ == "__main__":
    # Small deterministic example: 6-node directed graph, 2 edge types, features [4, 8, 4]
    N = 6
    features = [4, 8, 4]
    B = 2

    indices = np.array([[1, 2, 2, 3, 3, 4, 4, 5, 5],
                        [0, 0, 1, 1, 2, 2, 3, 3, 4]], dtype=np.int64)
    edge_types = np.array([1, 2, 1, 2, 1, 2, 1, 2, 1], dtype=np.int64)

    key = jax.random.PRNGKey(0)

    layers_data = []      # raw per-layer (indices, edge_types, in_f, out_f, wvec, bvec)
    layer_params = []     # padded dense (W^T bf16, bias f32, D_in, D_out) for the kernel
    for l in range(1, len(features)):
        in_f, out_f = features[l - 1], features[l]
        if l == 1:
            g_ind, g_et = indices, edge_types                               # self_loop=False
        else:
            g_ind, g_et = add_self_loops(N, indices, edge_types, start=1)   # self_loop=1
        max_t = int(g_et.max())
        bound = 1.0 / math.sqrt(in_f)
        key, k1, k2 = jax.random.split(key, 3)
        wvec = np.asarray(jax.random.uniform(k1, (max_t * out_f * in_f,),
                                             minval=-bound, maxval=bound), np.float32)
        bvec = np.asarray(jax.random.uniform(k2, (max_t * out_f,),
                                             minval=-bound, maxval=bound), np.float32)
        layers_data.append((g_ind, g_et, in_f, out_f, wvec, bvec))
        layer_params.append(dense_layer_params(N, g_ind, g_et, in_f, out_f, wvec, bvec))

    key, kx = jax.random.split(key)
    x_in = jax.random.normal(kx, (B, N, features[0]), dtype=jnp.float32)

    y_kernel = jax.block_until_ready(graph_conv_net_forward(x_in, layer_params, N))
    y_ref = reference_forward(np.asarray(x_in), layers_data, N)

    # bf16 weights/activations with f32 accumulation -> looser tolerance than pure f32.
    if not np.allclose(np.asarray(y_kernel), y_ref, atol=3e-2, rtol=3e-2):
        raise AssertionError(f"mismatch:\nkernel=\n{np.asarray(y_kernel)}\nref=\n{y_ref}")
    print("KERNEL_OK")
</pallas_src>

<mosaic_0001>
module attributes {stable_mosaic.version = 11 : i64} {
  func.func @kernel(%arg0: i32, %arg1: memref<16x128xbf16, #tpu.memory_space<vmem>>, %arg2: memref<128x128xbf16, #tpu.memory_space<vmem>>, %arg3: memref<1x128xf32, #tpu.memory_space<vmem>>, %arg4: memref<128x128xbf16, #tpu.memory_space<vmem>>, %arg5: memref<1x128xf32, #tpu.memory_space<vmem>>, %arg6: memref<16x128xf32, #tpu.memory_space<vmem>>) attributes {dimension_semantics = [#tpu.dimension_semantics<parallel>], iteration_bounds = array<i64: 2>, scalar_prefetch = 0 : i64, scratch_operands = 0 : i64, tpu.core_type = #tpu.core_type<tc>, window_params = [{transform_indices = @transform_0, window_bounds = array<i64: 16, 128>}, {pipeline_mode = #tpu.pipeline_mode<synchronous>, transform_indices = @transform_1, window_bounds = array<i64: 128, 128>}, {pipeline_mode = #tpu.pipeline_mode<synchronous>, transform_indices = @transform_2, window_bounds = array<i64: 1, 128>}, {pipeline_mode = #tpu.pipeline_mode<synchronous>, transform_indices = @transform_3, window_bounds = array<i64: 128, 128>}, {pipeline_mode = #tpu.pipeline_mode<synchronous>, transform_indices = @transform_4, window_bounds = array<i64: 1, 128>}, {transform_indices = @transform_5, window_bounds = array<i64: 16, 128>}]} {
    %c0 = arith.constant 0 : index
    %c0_0 = arith.constant 0 : index
    %0 = vector.load %arg1[%c0, %c0_0] : memref<16x128xbf16, #tpu.memory_space<vmem>>, vector<16x128xbf16>
    %c0_1 = arith.constant 0 : index
    %c0_2 = arith.constant 0 : index
    %1 = vector.load %arg2[%c0_1, %c0_2] : memref<128x128xbf16, #tpu.memory_space<vmem>>, vector<128x128xbf16>
    %c0_3 = arith.constant 0 : index
    %c0_4 = arith.constant 0 : index
    %2 = vector.load %arg3[%c0_3, %c0_4] : memref<1x128xf32, #tpu.memory_space<vmem>>, vector<1x128xf32>
    %cst = arith.constant dense<0.000000e+00> : vector<16x128xf32>
    %3 = tpu.matmul %0, %1, %cst {dimension_numbers = #tpu.dot_dimension_numbers<[1], [0], [0], [1], [0, 0, 1, 1], [], []>} : vector<16x128xbf16>, vector<128x128xbf16>, vector<16x128xf32> -> vector<16x128xf32>
    %4 = vector.broadcast %2 : vector<1x128xf32> to vector<16x128xf32>
    %5 = arith.addf %3, %4 : vector<16x128xf32>
    %cst_5 = arith.constant 0.000000e+00 : f32
    %6 = vector.broadcast %cst_5 : f32 to vector<16x128xf32>
    %7 = arith.maximumf %5, %6 : vector<16x128xf32>
    %8 = arith.truncf %7 : vector<16x128xf32> to vector<16x128xbf16>
    %c0_6 = arith.constant 0 : index
    %c0_7 = arith.constant 0 : index
    %9 = vector.load %arg4[%c0_6, %c0_7] : memref<128x128xbf16, #tpu.memory_space<vmem>>, vector<128x128xbf16>
    %c0_8 = arith.constant 0 : index
    %c0_9 = arith.constant 0 : index
    %10 = vector.load %arg5[%c0_8, %c0_9] : memref<1x128xf32, #tpu.memory_space<vmem>>, vector<1x128xf32>
    %cst_10 = arith.constant dense<0.000000e+00> : vector<16x128xf32>
    %11 = tpu.matmul %8, %9, %cst_10 {dimension_numbers = #tpu.dot_dimension_numbers<[1], [0], [0], [1], [0, 0, 1, 1], [], []>} : vector<16x128xbf16>, vector<128x128xbf16>, vector<16x128xf32> -> vector<16x128xf32>
    %12 = vector.broadcast %10 : vector<1x128xf32> to vector<16x128xf32>
    %13 = arith.addf %11, %12 : vector<16x128xf32>
    %c0_11 = arith.constant 0 : index
    %c0_12 = arith.constant 0 : index
    %14 = vector.load %arg6[%c0_11, %c0_12] : memref<16x128xf32, #tpu.memory_space<vmem>>, vector<16x128xf32>
    tpu.vector_store %arg6[%c0_11, %c0_12], %13 {strides = array<i32>} : memref<16x128xf32, #tpu.memory_space<vmem>>, vector<16x128xf32>,
    return
  }
  func.func @transform_0(%arg0: i32) -> (i32, i32) {
    %c0_i32 = arith.constant 0 : i32
    %c0_i32_0 = arith.constant 0 : i32
    return %arg0, %c0_i32 : i32, i32
  }
  func.func @transform_1(%arg0: i32) -> (i32, i32) {
    %c0_i32 = arith.constant 0 : i32
    %c0_i32_0 = arith.constant 0 : i32
    %c0_i32_1 = arith.constant 0 : i32
    return %c0_i32, %c0_i32_0 : i32, i32
  }
  func.func @transform_2(%arg0: i32) -> (i32, i32) {
    %c0_i32 = arith.constant 0 : i32
    %c0_i32_0 = arith.constant 0 : i32
    %c0_i32_1 = arith.constant 0 : i32
    return %c0_i32, %c0_i32_0 : i32, i32
  }
  func.func @transform_3(%arg0: i32) -> (i32, i32) {
    %c0_i32 = arith.constant 0 : i32
    %c0_i32_0 = arith.constant 0 : i32
    %c0_i32_1 = arith.constant 0 : i32
    return %c0_i32, %c0_i32_0 : i32, i32
  }
  func.func @transform_4(%arg0: i32) -> (i32, i32) {
    %c0_i32 = arith.constant 0 : i32
    %c0_i32_0 = arith.constant 0 : i32
    %c0_i32_1 = arith.constant 0 : i32
    return %c0_i32, %c0_i32_0 : i32, i32
  }
  func.func @transform_5(%arg0: i32) -> (i32, i32) {
    %c0_i32 = arith.constant 0 : i32
    %c0_i32_0 = arith.constant 0 : i32
    return %arg0, %c0_i32 : i32, i32
  }
}

module attributes {stable_mosaic.version = 11 : i64} {
  func.func @kernel(%arg0: i32, %arg1: memref<16x128xbf16, #tpu.memory_space<vmem>>, %arg2: memref<128x128xbf16, #tpu.memory_space<vmem>>, %arg3: memref<1x128xf32, #tpu.memory_space<vmem>>, %arg4: memref<128x128xbf16, #tpu.memory_space<vmem>>, %arg5: memref<1x128xf32, #tpu.memory_space<vmem>>, %arg6: memref<16x128xf32, #tpu.memory_space<vmem>>) attributes {dimension_semantics = [#tpu.dimension_semantics<parallel>], iteration_bounds = array<i64: 2>, scalar_prefetch = 0 : i64, scratch_operands = 0 : i64, tpu.core_type = #tpu.core_type<tc>, window_params = [{transform_indices = @transform_0, window_bounds = array<i64: 16, 128>}, {pipeline_mode = #tpu.pipeline_mode<synchronous>, transform_indices = @transform_1, window_bounds = array<i64: 128, 128>}, {pipeline_mode = #tpu.pipeline_mode<synchronous>, transform_indices = @transform_2, window_bounds = array<i64: 1, 128>}, {pipeline_mode = #tpu.pipeline_mode<synchronous>, transform_indices = @transform_3, window_bounds = array<i64: 128, 128>}, {pipeline_mode = #tpu.pipeline_mode<synchronous>, transform_indices = @transform_4, window_bounds = array<i64: 1, 128>}, {transform_indices = @transform_5, window_bounds = array<i64: 16, 128>}]} {
    %c0 = arith.constant 0 : index
    %c0_0 = arith.constant 0 : index
    %0 = vector.load %arg1[%c0, %c0_0] : memref<16x128xbf16, #tpu.memory_space<vmem>>, vector<16x128xbf16>
    %c0_1 = arith.constant 0 : index
    %c0_2 = arith.constant 0 : index
    %1 = vector.load %arg2[%c0_1, %c0_2] : memref<128x128xbf16, #tpu.memory_space<vmem>>, vector<128x128xbf16>
    %c0_3 = arith.constant 0 : index
    %c0_4 = arith.constant 0 : index
    %2 = vector.load %arg3[%c0_3, %c0_4] : memref<1x128xf32, #tpu.memory_space<vmem>>, vector<1x128xf32>
    %cst = arith.constant dense<0.000000e+00> : vector<16x128xf32>
    %3 = tpu.matmul %0, %1, %cst {dimension_numbers = #tpu.dot_dimension_numbers<[1], [0], [0], [1], [0, 0, 1, 1], [], []>} : vector<16x128xbf16>, vector<128x128xbf16>, vector<16x128xf32> -> vector<16x128xf32>
    %4 = vector.broadcast %2 : vector<1x128xf32> to vector<16x128xf32>
    %5 = arith.addf %3, %4 : vector<16x128xf32>
    %cst_5 = arith.constant 0.000000e+00 : f32
    %6 = vector.broadcast %cst_5 : f32 to vector<16x128xf32>
    %7 = arith.maximumf %5, %6 : vector<16x128xf32>
    %8 = arith.truncf %7 : vector<16x128xf32> to vector<16x128xbf16>
    %c0_6 = arith.constant 0 : index
    %c0_7 = arith.constant 0 : index
    %9 = vector.load %arg4[%c0_6, %c0_7] : memref<128x128xbf16, #tpu.memory_space<vmem>>, vector<128x128xbf16>
    %c0_8 = arith.constant 0 : index
    %c0_9 = arith.constant 0 : index
    %10 = vector.load %arg5[%c0_8, %c0_9] : memref<1x128xf32, #tpu.memory_space<vmem>>, vector<1x128xf32>
    %cst_10 = arith.constant dense<0.000000e+00> : vector<16x128xf32>
    %11 = tpu.matmul %8, %9, %cst_10 {dimension_numbers = #tpu.dot_dimension_numbers<[1], [0], [0], [1], [0, 0, 1, 1], [], []>} : vector<16x128xbf16>, vector<128x128xbf16>, vector<16x128xf32> -> vector<16x128xf32>
    %12 = vector.broadcast %10 : vector<1x128xf32> to vector<16x128xf32>
    %13 = arith.addf %11, %12 : vector<16x128xf32>
    %c0_11 = arith.constant 0 : index
    %c0_12 = arith.constant 0 : index
    %14 = vector.load %arg6[%c0_11, %c0_12] : memref<16x128xf32, #tpu.memory_space<vmem>>, vector<16x128xf32>
    tpu.vector_store %arg6[%c0_11, %c0_12], %13 {strides = array<i32>} : memref<16x128xf32, #tpu.memory_space<vmem>>, vector<16x128xf32>,
    return
  }
  func.func @transform_0(%arg0: i32) -> (i32, i32) {
    %c0_i32 = arith.constant 0 : i32
    %c0_i32_0 = arith.constant 0 : i32
    return %arg0, %c0_i32 : i32, i32
  }
  func.func @transform_1(%arg0: i32) -> (i32, i32) {
    %c0_i32 = arith.constant 0 : i32
    %c0_i32_0 = arith.constant 0 : i32
    %c0_i32_1 = arith.constant 0 : i32
    return %c0_i32, %c0_i32_0 : i32, i32
  }
  func.func @transform_2(%arg0: i32) -> (i32, i32) {
    %c0_i32 = arith.constant 0 : i32
    %c0_i32_0 = arith.constant 0 : i32
    %c0_i32_1 = arith.constant 0 : i32
    return %c0_i32, %c0_i32_0 : i32, i32
  }
  func.func @transform_3(%arg0: i32) -> (i32, i32) {
    %c0_i32 = arith.constant 0 : i32
    %c0_i32_0 = arith.constant 0 : i32
    %c0_i32_1 = arith.constant 0 : i32
    return %c0_i32, %c0_i32_0 : i32, i32
  }
  func.func @transform_4(%arg0: i32) -> (i32, i32) {
    %c0_i32 = arith.constant 0 : i32
    %c0_i32_0 = arith.constant 0 : i32
    %c0_i32_1 = arith.constant 0 : i32
    return %c0_i32, %c0_i32_0 : i32, i32
  }
  func.func @transform_5(%arg0: i32) -> (i32, i32) {
    %c0_i32 = arith.constant 0 : i32
    %c0_i32_0 = arith.constant 0 : i32
    return %arg0, %c0_i32 : i32, i32
  }
}

</mosaic_0001>

<llo_original>
// kernel: tpu_custom_call.1
$region0: #{tpu_custom_call.1}
  #allocation0 [shape = 'u32[]', space=smem, size = 0x4, offset = 0x4, fixed_abs, tag = 'smem constant byte address 0x4 - core index']
  #allocation1 [shape = 'u32[72,128]{1,0:T(1,128)}', space=vmem, size = 0x9000, scoped, tag = 'internal scratch']
  %s0 = inlined_call_operand.hbm [shape: bf16[32,128], index: 0, kind: input, shape index: {}]
  %s1 = inlined_call_operand.hbm [shape: bf16[128,128], index: 1, kind: input, shape index: {}]
  %s2 = inlined_call_operand.vmem [shape: f32[1,128], index: 2, kind: input, shape index: {}]
  %s3 = inlined_call_operand.hbm [shape: bf16[128,128], index: 3, kind: input, shape index: {}]
  %s4 = inlined_call_operand.vmem [shape: f32[1,128], index: 4, kind: input, shape index: {}]
  %s5 = inlined_call_operand.hbm [shape: f32[32,128], index: 5, kind: output, shape index: {}]
  %s6 = sld [smem:[#allocation0]]
  $region65: #{tpu_custom_call.1} parent=0
    _
  %s8 = ssub.s32 1, %s6
  %s9 = scalar_select 0, %s8, %s6
  $region1: #{tpu_custom_call.1} parent=0
    #allocation2 [shape = 'u8[8192]{0}', space=vmem, size = 0x2000, scoped, tag = 'input window, operand 0']
    #allocation3 [shape = 's32[2]{0}', space=sflag, size = 0x8, scoped, tag = 'scoped memory for tpu_custom_call.1']
    #allocation4 [shape = 's32[2]{0}', space=sflag, size = 0x8, scoped, tag = 'scoped memory for tpu_custom_call.1']
    #allocation5 [shape = 'u8[32768]{0}', space=vmem, size = 0x8000, scoped, tag = 'input window, operand 1, single buffered']
    #allocation6 [shape = 's32[1]{0}', space=sflag, size = 0x4, scoped, tag = 'scoped memory for tpu_custom_call.1']
    #allocation7 [shape = 'u8[32768]{0}', space=vmem, size = 0x8000, scoped, tag = 'input window, operand 3, single buffered']
    #allocation8 [shape = 'u8[16384]{0}', space=vmem, size = 0x4000, scoped, tag = 'output window, operand 0']
    %10 = vsyncpa [#allocation3], 0
    %s11 = scalar_lea.sflag [#allocation3], 1
    %12 = vsyncpa %s11, 0
    %13 = vsyncpa [#allocation6], 0
    %14 = vsyncpa [#allocation4], 0
    %s15 = scalar_lea.sflag [#allocation4], 1
    %16 = vsyncpa %s15, 0
    loop: start=0, step=1, limit=4
    $region2: #{tpu_custom_call.1} parent=1 // loop_pre_header
      _
    $region3: #{tpu_custom_call.1} parent=1 // loop_header
      %s18 = sphi 0, %s22
      %p19 = scmp.ge.s32.totalorder %s18, 4
      %s28 = sphi 0, %s30
      %s31 = sphi 0, %s28
      %s32 = sphi 0, %s31
      %s48 = sphi 0, %s32
      %s52 = sphi 0, %s52
      %s54 = sphi 0, %s52
      %s55 = sphi 0, %s54
      %s69 = sphi 0, %s55
      %s73 = sphi 0, %s73
      %s75 = sphi 0, %s73
      %s76 = sphi 0, %s75
      %s90 = sphi 0, %s76
      %s94 = sphi 0, %s94
      %s96 = sphi 0, %s94
      %s97 = sphi 0, %s96
      %s111 = sphi 0, %s97
      %s115 = sphi 0, %s115
      %s117 = sphi 0, %s115
      %s118 = sphi 0, %s117
      %s132 = sphi 0, %s118
      %s138 = sphi 0, %s140
      %s141 = sphi 0, %s138
      %s142 = sphi 0, %s141
      %s158 = sphi 0, %s142
    $region4: #{tpu_custom_call.1} parent=1 // loop_header_branch
      %21 = sbr.rel (%p19) target = $region8
    $region5: #{tpu_custom_call.1} parent=1 // loop_body
      %s23 = ssub.s32 %s18, 1
      %s24 = ssub.s32 %s18, 2
      %s25 = sadd.s32 %s18, 1
      %s26 = ssub.s32 %s18, %s25
      %p27 = scmp.eq.s32.totalorder %s26, 0
      %s29 = sadd.s32 %s28, 1
      %s30 = scalar_select %p27, %s28, %s29
      %p33 = pneg %p27
      %p34 = scmp.eq.s32.totalorder %s18, 1
      %p35 = por %p33, %p34
      %p36 = scmp.ne.s32.totalorder %s28, %s31
      %p37 = scmp.eq.s32.totalorder %s18, 0
      %p38 = por %p36, %p37
      %p39 = scmp.ne.s32.totalorder %s28, %s31
      %p40 = scmp.eq.s32.totalorder %s23, 1
      %p41 = por %p39, %p40
      %p42 = scmp.ne.s32.totalorder %s31, %s32
      %p43 = scmp.eq.s32.totalorder %s23, 0
      %p44 = por %p42, %p43
      %p45 = scmp.ne.s32.totalorder %s31, %s32
      %p46 = scmp.eq.s32.totalorder %s24, 1
      %p47 = por %p45, %p46
      %p49 = scmp.ne.s32.totalorder %s32, %s48
      %p50 = scmp.eq.s32.totalorder %s24, 0
      %p51 = por %p49, %p50
      %s53 = sadd.s32 %s52, 1
      %p56 = scmp.eq.s32.totalorder %s18, 1
      %p57 = scmp.ne.s32.totalorder %s52, %s54
      %p58 = scmp.eq.s32.totalorder %s18, 0
      %p59 = por %p57, %p58
      %p60 = scmp.ne.s32.totalorder %s52, %s54
      %p61 = scmp.eq.s32.totalorder %s23, 1
      %p62 = por %p60, %p61
      %p63 = scmp.ne.s32.totalorder %s54, %s55
      %p64 = scmp.eq.s32.totalorder %s23, 0
      %p65 = por %p63, %p64
      %p66 = scmp.ne.s32.totalorder %s54, %s55
      %p67 = scmp.eq.s32.totalorder %s24, 1
      %p68 = por %p66, %p67
      %p70 = scmp.ne.s32.totalorder %s55, %s69
      %p71 = scmp.eq.s32.totalorder %s24, 0
      %p72 = por %p70, %p71
      %s74 = sadd.s32 %s73, 1
      %p77 = scmp.eq.s32.totalorder %s18, 1
      %p78 = scmp.ne.s32.totalorder %s73, %s75
      %p79 = scmp.eq.s32.totalorder %s18, 0
      %p80 = por %p78, %p79
      %p81 = scmp.ne.s32.totalorder %s73, %s75
      %p82 = scmp.eq.s32.totalorder %s23, 1
      %p83 = por %p81, %p82
      %p84 = scmp.ne.s32.totalorder %s75, %s76
      %p85 = scmp.eq.s32.totalorder %s23, 0
      %p86 = por %p84, %p85
      %p87 = scmp.ne.s32.totalorder %s75, %s76
      %p88 = scmp.eq.s32.totalorder %s24, 1
      %p89 = por %p87, %p88
      %p91 = scmp.ne.s32.totalorder %s76, %s90
      %p92 = scmp.eq.s32.totalorder %s24, 0
      %p93 = por %p91, %p92
      %s95 = sadd.s32 %s94, 1
      %p98 = scmp.eq.s32.totalorder %s18, 1
      %p99 = scmp.ne.s32.totalorder %s94, %s96
      %p100 = scmp.eq.s32.totalorder %s18, 0
      %p101 = por %p99, %p100
      %p102 = scmp.ne.s32.totalorder %s94, %s96
      %p103 = scmp.eq.s32.totalorder %s23, 1
      %p104 = por %p102, %p103
      %p105 = scmp.ne.s32.totalorder %s96, %s97
      %p106 = scmp.eq.s32.totalorder %s23, 0
      %p107 = por %p105, %p106
      %p108 = scmp.ne.s32.totalorder %s96, %s97
      %p109 = scmp.eq.s32.totalorder %s24, 1
      %p110 = por %p108, %p109
      %p112 = scmp.ne.s32.totalorder %s97, %s111
      %p113 = scmp.eq.s32.totalorder %s24, 0
      %p114 = por %p112, %p113
      %s116 = sadd.s32 %s115, 1
      %p119 = scmp.eq.s32.totalorder %s18, 1
      %p120 = scmp.ne.s32.totalorder %s115, %s117
      %p121 = scmp.eq.s32.totalorder %s18, 0
      %p122 = por %p120, %p121
      %p123 = scmp.ne.s32.totalorder %s115, %s117
      %p124 = scmp.eq.s32.totalorder %s23, 1
      %p125 = por %p123, %p124
      %p126 = scmp.ne.s32.totalorder %s117, %s118
      %p127 = scmp.eq.s32.totalorder %s23, 0
      %p128 = por %p126, %p127
      %p129 = scmp.ne.s32.totalorder %s117, %s118
      %p130 = scmp.eq.s32.totalorder %s24, 1
      %p131 = por %p129, %p130
      %p133 = scmp.ne.s32.totalorder %s118, %s132
      %p134 = scmp.eq.s32.totalorder %s24, 0
      %p135 = por %p133, %p134
      %s136 = ssub.s32 %s18, %s25
      %p137 = scmp.eq.s32.totalorder %s136, 0
      %s139 = sadd.s32 %s138, 1
      %s140 = scalar_select %p137, %s138, %s139
      %p143 = pneg %p137
      %p144 = scmp.eq.s32.totalorder %s18, 1
      %p145 = por %p143, %p144
      %p146 = scmp.ne.s32.totalorder %s138, %s141
      %p147 = scmp.eq.s32.totalorder %s18, 0
      %p148 = por %p146, %p147
      %p149 = scmp.ne.s32.totalorder %s138, %s141
      %p150 = scmp.eq.s32.totalorder %s23, 1
      %p151 = por %p149, %p150
      %p152 = scmp.ne.s32.totalorder %s141, %s142
      %p153 = scmp.eq.s32.totalorder %s23, 0
      %p154 = por %p152, %p153
      %p155 = scmp.ne.s32.totalorder %s141, %s142
      %p156 = scmp.eq.s32.totalorder %s24, 1
      %p157 = por %p155, %p156
      %p159 = scmp.ne.s32.totalorder %s142, %s158
      %p160 = scmp.eq.s32.totalorder %s24, 0
      %p161 = por %p159, %p160
      %p162 = scmp.le.s32.totalorder 1, %s18
      %p163 = scmp.lt.s32.totalorder %s18, 3
      %p164 = pnand %p162, %p163
      %p165 = pneg %p164
      // Predicated region
      $region9: #{tpu_custom_call.1} parent=5 // pred_check
        _
      $region10: #{tpu_custom_call.1} parent=5 // pred_check_branch
        %167 = sbr.rel (%p164) target = $region12
      $region11: #{tpu_custom_call.1} parent=5 // pred_region
        %s168 = ssub.s32 %s18, 1
        // Predicated region
        $region13: #{tpu_custom_call.1} parent=11 // pred_check
          %p169 = pneg %p65
        $region14: #{tpu_custom_call.1} parent=11 // pred_check_branch
          %171 = sbr.rel (%p169) target = $region16
        $region15: #{tpu_custom_call.1} parent=11 // pred_region
          %173 = vsyncadd [#allocation6], 0
          %s174 = sshll.u32 %s1, 4
          %s175 = int_to_ptr.hbm [resolvable:$true] %s174
          %s176 = sshll.u32 [#allocation5], 4
          %s177 = int_to_ptr.vmem [resolvable:$true] %s176
          %182 = dma.hbm_to_vmem [thread:$0]  %s175, 1024, %s177, [#allocation6], 64, 64, 4
        $region16: #{tpu_custom_call.1} parent=11 // pred_fallthru
          _
        // Predicated region
        $region17: #{tpu_custom_call.1} parent=11 // pred_check
          %p183 = pneg %p86
        $region18: #{tpu_custom_call.1} parent=11 // pred_check_branch
          %185 = sbr.rel (%p183) target = $region20
        $region19: #{tpu_custom_call.1} parent=11 // pred_region
          _
        $region20: #{tpu_custom_call.1} parent=11 // pred_fallthru
          _
        // Predicated region
        $region21: #{tpu_custom_call.1} parent=11 // pred_check
          %p186 = pneg %p107
        $region22: #{tpu_custom_call.1} parent=11 // pred_check_branch
          %188 = sbr.rel (%p186) target = $region24
        $region23: #{tpu_custom_call.1} parent=11 // pred_region
          %190 = vsyncadd [#allocation6], 0
          %s191 = sshll.u32 %s3, 4
          %s192 = int_to_ptr.hbm [resolvable:$true] %s191
          %s193 = sshll.u32 [#allocation7], 4
          %s194 = int_to_ptr.vmem [resolvable:$true] %s193
          %199 = dma.hbm_to_vmem [thread:$0]  %s192, 1024, %s194, [#allocation6], 64, 64, 4
        $region24: #{tpu_custom_call.1} parent=11 // pred_fallthru
          _
        // Predicated region
        $region25: #{tpu_custom_call.1} parent=11 // pred_check
          %p200 = pneg %p128
        $region26: #{tpu_custom_call.1} parent=11 // pred_check_branch
          %202 = sbr.rel (%p200) target = $region28
        $region27: #{tpu_custom_call.1} parent=11 // pred_region
          _
        $region28: #{tpu_custom_call.1} parent=11 // pred_fallthru
          _
      $region12: #{tpu_custom_call.1} parent=5 // pred_fallthru
        _
      %p203 = scmp.lt.s32.totalorder %s18, 2
      // Predicated region
      $region29: #{tpu_custom_call.1} parent=5 // pred_check
        %p204 = pneg %p203
      $region30: #{tpu_custom_call.1} parent=5 // pred_check_branch
        %206 = sbr.rel (%p204) target = $region32
      $region31: #{tpu_custom_call.1} parent=5 // pred_region
        // Predicated region
        $region33: #{tpu_custom_call.1} parent=31 // pred_check
          %p207 = pneg %p38
        $region34: #{tpu_custom_call.1} parent=31 // pred_check_branch
          %209 = sbr.rel (%p207) target = $region36
        $region35: #{tpu_custom_call.1} parent=31 // pred_region
          %s210 = sand.u32 %s28, 1
          %s211 = scalar_lea.sflag [#allocation3], %s210
          %s212 = sand.u32 %s28, 1
          %s213 = smul.addr %s212, 8
          %s214 = scalar_lea.vmem [#allocation2], %s213
          %s215 = smul.u32 2, %s18
          %217 = vsyncadd %s211, 0
          %s218 = smul.addr %s215, 4
          %s219 = scalar_lea.hbm %s0, %s218
          %s220 = sshll.u32 %s219, 4
          %s221 = int_to_ptr.hbm [resolvable:$true] %s220
          %s222 = sshll.u32 %s214, 4
          %s223 = int_to_ptr.vmem [resolvable:$true] %s222
          %228 = dma.hbm_to_vmem [thread:$0]  %s221, 128, %s223, %s211, 64, 64, 4
        $region36: #{tpu_custom_call.1} parent=31 // pred_fallthru
          _
      $region32: #{tpu_custom_call.1} parent=5 // pred_fallthru
        _
      %p229 = scmp.le.s32.totalorder 1, %s18
      %p230 = scmp.lt.s32.totalorder %s18, 3
      %p231 = pnand %p229, %p230
      %p232 = pneg %p231
      // Predicated region
      $region37: #{tpu_custom_call.1} parent=5 // pred_check
        _
      $region38: #{tpu_custom_call.1} parent=5 // pred_check_branch
        %234 = sbr.rel (%p231) target = $region40
      $region39: #{tpu_custom_call.1} parent=5 // pred_region
        %s235 = ssub.s32 %s18, 1
        %s236 = sand.u32 %s31, 1
        %s237 = scalar_lea.sflag [#allocation3], %s236
        %s238 = sand.u32 %s31, 1
        %s239 = smul.addr %s238, 8
        %s240 = scalar_lea.vmem [#allocation2], %s239
        // Predicated region
        $region41: #{tpu_custom_call.1} parent=39 // pred_check
          %p241 = pneg %p44
        $region42: #{tpu_custom_call.1} parent=39 // pred_check_branch
          %243 = sbr.rel (%p241) target = $region44
        $region43: #{tpu_custom_call.1} parent=39 // pred_region
          %245 = dma.done %s237, 128
        $region44: #{tpu_custom_call.1} parent=39 // pred_fallthru
          _
        // Predicated region
        $region45: #{tpu_custom_call.1} parent=39 // pred_check
          %p246 = pneg %p65
        $region46: #{tpu_custom_call.1} parent=39 // pred_check_branch
          %248 = sbr.rel (%p246) target = $region48
        $region47: #{tpu_custom_call.1} parent=39 // pred_region
          %250 = dma.done [#allocation6], 1024
        $region48: #{tpu_custom_call.1} parent=39 // pred_fallthru
          _
        // Predicated region
        $region49: #{tpu_custom_call.1} parent=39 // pred_check
          %p251 = pneg %p107
        $region50: #{tpu_custom_call.1} parent=39 // pred_check_branch
          %253 = sbr.rel (%p251) target = $region52
        $region51: #{tpu_custom_call.1} parent=39 // pred_region
          %255 = dma.done [#allocation6], 1024
        $region52: #{tpu_custom_call.1} parent=39 // pred_fallthru
          _
        %s256 = sand.u32 %s31, 1
        %s257 = scalar_lea.sflag [#allocation3], %s256
        %s258 = sand.u32 %s31, 1
        %s259 = smul.addr %s258, 8
        %s260 = scalar_lea.vmem [#allocation2], %s259
        %p261 = pneg %p44
        %p262 = pneg %p41
        %p263 = pneg %p65
        %p264 = pneg %p62
        %p265 = pneg %p86
        %p266 = pneg %p83
        %p267 = pneg %p107
        %p268 = pneg %p104
        %p269 = pneg %p128
        %p270 = pneg %p125
        %p271 = pneg %p154
        %p272 = pneg %p151
        %s273 = sand.u32 %s141, 1
        %s274 = scalar_lea.sflag [#allocation4], %s273
        %s275 = sand.u32 %s141, 1
        %s276 = smul.addr %s275, 16
        %s277 = scalar_lea.vmem [#allocation8], %s276
        %s278 = smul.u32 2, %s23
        %s279 = smul.u32 2, %s23
        %v280 = vld [vmem:[%s240] sm:$0xf]
        %v281 = vld [vmem:[%s240 + $0x4] sm:$0xf]
        %v282 = vld [vmem:[#allocation5] sm:$0xf]
        %v283 = vld [vmem:[#allocation5 + $0x4] sm:$0xf]
        %v284 = vld [vmem:[#allocation5 + $0x8] sm:$0xf]
        %v285 = vld [vmem:[#allocation5 + $0xc] sm:$0xf]
        %v286 = vld [vmem:[#allocation5 + $0x10] sm:$0xf]
        %v287 = vld [vmem:[#allocation5 + $0x14] sm:$0xf]
        %v288 = vld [vmem:[#allocation5 + $0x18] sm:$0xf]
        %v289 = vld [vmem:[#allocation5 + $0x1c] sm:$0xf]
        %v290 = vld [vmem:[#allocation5 + $0x20] sm:$0xf]
        %v291 = vld [vmem:[#allocation5 + $0x24] sm:$0xf]
        %v292 = vld [vmem:[#allocation5 + $0x28] sm:$0xf]
        %v293 = vld [vmem:[#allocation5 + $0x2c] sm:$0xf]
        %v294 = vld [vmem:[#allocation5 + $0x30] sm:$0xf]
        %v295 = vld [vmem:[#allocation5 + $0x34] sm:$0xf]
        %v296 = vld [vmem:[#allocation5 + $0x38] sm:$0xf]
        %v297 = vld [vmem:[#allocation5 + $0x3c] sm:$0xf]
        %v298 = vld [vmem:[%s2] sm:$0x1]
        %v300 = vperm.slane %v298, 0
        %v304 = vunpack.c.l.b16 %v280
        %v305 = vunpack.c.l.b16 %v281
        %v306 = vpack.c.b16 %v305, %v304
        %v324 = vunpack.c.l.b16 %v282
        %v325 = vunpack.c.l.b16 %v283
        %v326 = vunpack.c.l.b16 %v284
        %v327 = vunpack.c.l.b16 %v285
        %v328 = vunpack.c.l.b16 %v286
        %v329 = vunpack.c.l.b16 %v287
        %v330 = vunpack.c.l.b16 %v288
        %v331 = vunpack.c.l.b16 %v289
        %v332 = vunpack.c.l.b16 %v290
        %v333 = vunpack.c.l.b16 %v291
        %v334 = vunpack.c.l.b16 %v292
        %v335 = vunpack.c.l.b16 %v293
        %v336 = vunpack.c.l.b16 %v294
        %v337 = vunpack.c.l.b16 %v295
        %v338 = vunpack.c.l.b16 %v296
        %v339 = vunpack.c.l.b16 %v297
        %v340 = vpack.c.b16 %v325, %v324
        %v341 = vpack.c.b16 %v327, %v326
        %v342 = vpack.c.b16 %v329, %v328
        %v343 = vpack.c.b16 %v331, %v330
        %v344 = vpack.c.b16 %v333, %v332
        %v345 = vpack.c.b16 %v335, %v334
        %v346 = vpack.c.b16 %v337, %v336
        %v347 = vpack.c.b16 %v339, %v338
        %356 = vmatpush.bf16.msra.mxu0 %v347
        %357 = vmatpush.bf16.msra.mxu0 %v346
        %358 = vmatpush.bf16.msra.mxu0 %v345
        %359 = vmatpush.bf16.msra.mxu0 %v344
        %360 = vmatpush.bf16.msra.mxu0 %v343
        %361 = vmatpush.bf16.msra.mxu0 %v342
        %362 = vmatpush.bf16.msra.mxu0 %v341
        %363 = vmatpush.bf16.msra.mxu0 %v340
        %364 = vmatmul.bf16.gmra.mxu0 %v306
        %v365 = vpop.f32.mrf.mxu0
        %v366 = vadd.f32 %v300, %v365
        %v367 = vpop.f32.mrf.mxu0
        %v368 = vadd.f32 %v300, %v367
        %369 = vdwg.mxu0
        %v370 = vmax.f32 %v366, 0.0
        %v371 = vmax.f32 %v368, 0.0
        %v372 = vpack.c.bf16 %v371, %v370
        %v373 = vld [vmem:[#allocation7] sm:$0xf]
        %v374 = vld [vmem:[#allocation7 + $0x4] sm:$0xf]
        %v375 = vld [vmem:[#allocation7 + $0x8] sm:$0xf]
        %v376 = vld [vmem:[#allocation7 + $0xc] sm:$0xf]
        %v377 = vld [vmem:[#allocation7 + $0x10] sm:$0xf]
        %v378 = vld [vmem:[#allocation7 + $0x14] sm:$0xf]
        %v379 = vld [vmem:[#allocation7 + $0x18] sm:$0xf]
        %v380 = vld [vmem:[#allocation7 + $0x1c] sm:$0xf]
        %v381 = vld [vmem:[#allocation7 + $0x20] sm:$0xf]
        %v382 = vld [vmem:[#allocation7 + $0x24] sm:$0xf]
        %v383 = vld [vmem:[#allocation7 + $0x28] sm:$0xf]
        %v384 = vld [vmem:[#allocation7 + $0x2c] sm:$0xf]
        %v385 = vld [vmem:[#allocation7 + $0x30] sm:$0xf]
        %v386 = vld [vmem:[#allocation7 + $0x34] sm:$0xf]
        %v387 = vld [vmem:[#allocation7 + $0x38] sm:$0xf]
        %v388 = vld [vmem:[#allocation7 + $0x3c] sm:$0xf]
        %v389 = vld [vmem:[%s4] sm:$0x1]
        %v391 = vperm.slane %v389, 0
        %v409 = vunpack.c.l.b16 %v373
        %v410 = vunpack.c.l.b16 %v374
        %v411 = vunpack.c.l.b16 %v375
        %v412 = vunpack.c.l.b16 %v376
        %v413 = vunpack.c.l.b16 %v377
        %v414 = vunpack.c.l.b16 %v378
        %v415 = vunpack.c.l.b16 %v379
        %v416 = vunpack.c.l.b16 %v380
        %v417 = vunpack.c.l.b16 %v381
        %v418 = vunpack.c.l.b16 %v382
        %v419 = vunpack.c.l.b16 %v383
        %v420 = vunpack.c.l.b16 %v384
        %v421 = vunpack.c.l.b16 %v385
        %v422 = vunpack.c.l.b16 %v386
        %v423 = vunpack.c.l.b16 %v387
        %v424 = vunpack.c.l.b16 %v388
        %v425 = vpack.c.b16 %v410, %v409
        %v426 = vpack.c.b16 %v412, %v411
        %v427 = vpack.c.b16 %v414, %v413
        %v428 = vpack.c.b16 %v416, %v415
        %v429 = vpack.c.b16 %v418, %v417
        %v430 = vpack.c.b16 %v420, %v419
        %v431 = vpack.c.b16 %v422, %v421
        %v432 = vpack.c.b16 %v424, %v423
        %441 = vmatpush.bf16.msra.mxu0 %v432
        %442 = vmatpush.bf16.msra.mxu0 %v431
        %443 = vmatpush.bf16.msra.mxu0 %v430
        %444 = vmatpush.bf16.msra.mxu0 %v429
        %445 = vmatpush.bf16.msra.mxu0 %v428
        %446 = vmatpush.bf16.msra.mxu0 %v427
        %447 = vmatpush.bf16.msra.mxu0 %v426
        %448 = vmatpush.bf16.msra.mxu0 %v425
        %449 = vmatmul.bf16.gmra.mxu0 %v372
        %v450 = vpop.f32.mrf.mxu0
        %v451 = vadd.f32 %v391, %v450
        %v452 = vpop.f32.mrf.mxu0
        %v453 = vadd.f32 %v391, %v452
        %454 = vdwg.mxu0
        %455 = vst [vmem:[%s277] sm:$0xff] %v451
        %456 = vst [vmem:[%s277 + $0x8] sm:$0xff] %v453
        %s457 = sand.u32 %s141, 1
        %s458 = scalar_lea.sflag [#allocation4], %s457
        %s459 = sand.u32 %s141, 1
        %s460 = smul.addr %s459, 16
        %s461 = scalar_lea.vmem [#allocation8], %s460
        // Predicated region
        $region53: #{tpu_custom_call.1} parent=39 // pred_check
          %p462 = pneg %p151
        $region54: #{tpu_custom_call.1} parent=39 // pred_check_branch
          %464 = sbr.rel (%p462) target = $region56
        $region55: #{tpu_custom_call.1} parent=39 // pred_region
          %s465 = smul.u32 2, %s23
          %467 = vsyncadd %s458, 0
          %s468 = smul.addr %s465, 8
          %s469 = scalar_lea.hbm %s5, %s468
          %s470 = sshll.u32 %s461, 4
          %s471 = int_to_ptr.vmem [resolvable:$true] %s470
          %s472 = sshll.u32 %s469, 4
          %s473 = int_to_ptr.hbm [resolvable:$true] %s472
          %478 = dma.vmem_to_hbm [thread:$0]  %s471, 256, %s473, %s458, 128, 128, 8
        $region56: #{tpu_custom_call.1} parent=39 // pred_fallthru
          _
      $region40: #{tpu_custom_call.1} parent=5 // pred_fallthru
        _
      %p479 = scmp.le.s32.totalorder 2, %s18
      // Predicated region
      $region57: #{tpu_custom_call.1} parent=5 // pred_check
        %p480 = pneg %p479
      $region58: #{tpu_custom_call.1} parent=5 // pred_check_branch
        %482 = sbr.rel (%p480) target = $region60
      $region59: #{tpu_custom_call.1} parent=5 // pred_region
        %s483 = ssub.s32 %s18, 2
        // Predicated region
        $region61: #{tpu_custom_call.1} parent=59 // pred_check
          %p484 = pneg %p157
        $region62: #{tpu_custom_call.1} parent=59 // pred_check_branch
          %486 = sbr.rel (%p484) target = $region64
        $region63: #{tpu_custom_call.1} parent=59 // pred_region
          %s487 = sand.u32 %s142, 1
          %s488 = scalar_lea.sflag [#allocation4], %s487
          %s489 = sand.u32 %s142, 1
          %s490 = smul.addr %s489, 16
          %s491 = scalar_lea.vmem [#allocation8], %s490
          %493 = dma.done %s488, 256
        $region64: #{tpu_custom_call.1} parent=59 // pred_fallthru
          _
      $region60: #{tpu_custom_call.1} parent=5 // pred_fallthru
        _
    $region6: #{tpu_custom_call.1} parent=1 // loop_footer
      %s22 = sadd.s32 1, %s18
    $region7: #{tpu_custom_call.1} parent=1 // loop_footer_branch
      %17 = sbr.rel target = $region3
    $region8: #{tpu_custom_call.1} parent=1 // loop_exit
      _
    %494 = vsyncpa [#allocation3], 1
    %s495 = scalar_lea.sflag [#allocation3], 1
    %496 = vsyncpa %s495, 1
    %497 = vsyncpa [#allocation6], 1
    %498 = vsyncpa [#allocation4], 1
    %s499 = scalar_lea.sflag [#allocation4], 1
    %500 = vsyncpa %s499, 1

// kernel: tpu_custom_call.1
$region0: #{tpu_custom_call.1}
  #allocation0 [shape = 'u32[]', space=smem, size = 0x4, offset = 0x4, fixed_abs, tag = 'smem constant byte address 0x4 - core index']
  #allocation1 [shape = 'u32[72,128]{1,0:T(1,128)}', space=vmem, size = 0x9000, scoped, tag = 'internal scratch']
  %s0 = inlined_call_operand.hbm [shape: bf16[32,128], index: 0, kind: input, shape index: {}]
  %s1 = inlined_call_operand.hbm [shape: bf16[128,128], index: 1, kind: input, shape index: {}]
  %s2 = inlined_call_operand.vmem [shape: f32[1,128], index: 2, kind: input, shape index: {}]
  %s3 = inlined_call_operand.hbm [shape: bf16[128,128], index: 3, kind: input, shape index: {}]
  %s4 = inlined_call_operand.vmem [shape: f32[1,128], index: 4, kind: input, shape index: {}]
  %s5 = inlined_call_operand.hbm [shape: f32[32,128], index: 5, kind: output, shape index: {}]
  %s6 = sld [smem:[#allocation0]]
  $region65: #{tpu_custom_call.1} parent=0
    _
  %s8 = ssub.s32 1, %s6
  %s9 = scalar_select 0, %s8, %s6
  $region1: #{tpu_custom_call.1} parent=0
    #allocation2 [shape = 'u8[8192]{0}', space=vmem, size = 0x2000, scoped, tag = 'input window, operand 0']
    #allocation3 [shape = 's32[2]{0}', space=sflag, size = 0x8, scoped, tag = 'scoped memory for tpu_custom_call.1']
    #allocation4 [shape = 's32[2]{0}', space=sflag, size = 0x8, scoped, tag = 'scoped memory for tpu_custom_call.1']
    #allocation5 [shape = 'u8[32768]{0}', space=vmem, size = 0x8000, scoped, tag = 'input window, operand 1, single buffered']
    #allocation6 [shape = 's32[1]{0}', space=sflag, size = 0x4, scoped, tag = 'scoped memory for tpu_custom_call.1']
    #allocation7 [shape = 'u8[32768]{0}', space=vmem, size = 0x8000, scoped, tag = 'input window, operand 3, single buffered']
    #allocation8 [shape = 'u8[16384]{0}', space=vmem, size = 0x4000, scoped, tag = 'output window, operand 0']
    %10 = vsyncpa [#allocation3], 0
    %s11 = scalar_lea.sflag [#allocation3], 1
    %12 = vsyncpa %s11, 0
    %13 = vsyncpa [#allocation6], 0
    %14 = vsyncpa [#allocation4], 0
    %s15 = scalar_lea.sflag [#allocation4], 1
    %16 = vsyncpa %s15, 0
    loop: start=0, step=1, limit=4
    $region2: #{tpu_custom_call.1} parent=1 // loop_pre_header
      _
    $region3: #{tpu_custom_call.1} parent=1 // loop_header
      %s18 = sphi 0, %s22
      %p19 = scmp.ge.s32.totalorder %s18, 4
      %s28 = sphi 0, %s30
      %s31 = sphi 0, %s28
      %s32 = sphi 0, %s31
      %s48 = sphi 0, %s32
      %s52 = sphi 0, %s52
      %s54 = sphi 0, %s52
      %s55 = sphi 0, %s54
      %s69 = sphi 0, %s55
      %s73 = sphi 0, %s73
      %s75 = sphi 0, %s73
      %s76 = sphi 0, %s75
      %s90 = sphi 0, %s76
      %s94 = sphi 0, %s94
      %s96 = sphi 0, %s94
      %s97 = sphi 0, %s96
      %s111 = sphi 0, %s97
      %s115 = sphi 0, %s115
      %s117 = sphi 0, %s115
      %s118 = sphi 0, %s117
      %s132 = sphi 0, %s118
      %s138 = sphi 0, %s140
      %s141 = sphi 0, %s138
      %s142 = sphi 0, %s141
      %s158 = sphi 0, %s142
    $region4: #{tpu_custom_call.1} parent=1 // loop_header_branch
      %21 = sbr.rel (%p19) target = $region8
    $region5: #{tpu_custom_call.1} parent=1 // loop_body
      %s23 = ssub.s32 %s18, 1
      %s24 = ssub.s32 %s18, 2
      %s25 = sadd.s32 %s18, 1
      %s26 = ssub.s32 %s18, %s25
      %p27 = scmp.eq.s32.totalorder %s26, 0
      %s29 = sadd.s32 %s28, 1
      %s30 = scalar_select %p27, %s28, %s29
      %p33 = pneg %p27
      %p34 = scmp.eq.s32.totalorder %s18, 1
      %p35 = por %p33, %p34
      %p36 = scmp.ne.s32.totalorder %s28, %s31
      %p37 = scmp.eq.s32.totalorder %s18, 0
      %p38 = por %p36, %p37
      %p39 = scmp.ne.s32.totalorder %s28, %s31
      %p40 = scmp.eq.s32.totalorder %s23, 1
      %p41 = por %p39, %p40
      %p42 = scmp.ne.s32.totalorder %s31, %s32
      %p43 = scmp.eq.s32.totalorder %s23, 0
      %p44 = por %p42, %p43
      %p45 = scmp.ne.s32.totalorder %s31, %s32
      %p46 = scmp.eq.s32.totalorder %s24, 1
      %p47 = por %p45, %p46
      %p49 = scmp.ne.s32.totalorder %s32, %s48
      %p50 = scmp.eq.s32.totalorder %s24, 0
      %p51 = por %p49, %p50
      %s53 = sadd.s32 %s52, 1
      %p56 = scmp.eq.s32.totalorder %s18, 1
      %p57 = scmp.ne.s32.totalorder %s52, %s54
      %p58 = scmp.eq.s32.totalorder %s18, 0
      %p59 = por %p57, %p58
      %p60 = scmp.ne.s32.totalorder %s52, %s54
      %p61 = scmp.eq.s32.totalorder %s23, 1
      %p62 = por %p60, %p61
      %p63 = scmp.ne.s32.totalorder %s54, %s55
      %p64 = scmp.eq.s32.totalorder %s23, 0
      %p65 = por %p63, %p64
      %p66 = scmp.ne.s32.totalorder %s54, %s55
      %p67 = scmp.eq.s32.totalorder %s24, 1
      %p68 = por %p66, %p67
      %p70 = scmp.ne.s32.totalorder %s55, %s69
      %p71 = scmp.eq.s32.totalorder %s24, 0
      %p72 = por %p70, %p71
      %s74 = sadd.s32 %s73, 1
      %p77 = scmp.eq.s32.totalorder %s18, 1
      %p78 = scmp.ne.s32.totalorder %s73, %s75
      %p79 = scmp.eq.s32.totalorder %s18, 0
      %p80 = por %p78, %p79
      %p81 = scmp.ne.s32.totalorder %s73, %s75
      %p82 = scmp.eq.s32.totalorder %s23, 1
      %p83 = por %p81, %p82
      %p84 = scmp.ne.s32.totalorder %s75, %s76
      %p85 = scmp.eq.s32.totalorder %s23, 0
      %p86 = por %p84, %p85
      %p87 = scmp.ne.s32.totalorder %s75, %s76
      %p88 = scmp.eq.s32.totalorder %s24, 1
      %p89 = por %p87, %p88
      %p91 = scmp.ne.s32.totalorder %s76, %s90
      %p92 = scmp.eq.s32.totalorder %s24, 0
      %p93 = por %p91, %p92
      %s95 = sadd.s32 %s94, 1
      %p98 = scmp.eq.s32.totalorder %s18, 1
      %p99 = scmp.ne.s32.totalorder %s94, %s96
      %p100 = scmp.eq.s32.totalorder %s18, 0
      %p101 = por %p99, %p100
      %p102 = scmp.ne.s32.totalorder %s94, %s96
      %p103 = scmp.eq.s32.totalorder %s23, 1
      %p104 = por %p102, %p103
      %p105 = scmp.ne.s32.totalorder %s96, %s97
      %p106 = scmp.eq.s32.totalorder %s23, 0
      %p107 = por %p105, %p106
      %p108 = scmp.ne.s32.totalorder %s96, %s97
      %p109 = scmp.eq.s32.totalorder %s24, 1
      %p110 = por %p108, %p109
      %p112 = scmp.ne.s32.totalorder %s97, %s111
      %p113 = scmp.eq.s32.totalorder %s24, 0
      %p114 = por %p112, %p113
      %s116 = sadd.s32 %s115, 1
      %p119 = scmp.eq.s32.totalorder %s18, 1
      %p120 = scmp.ne.s32.totalorder %s115, %s117
      %p121 = scmp.eq.s32.totalorder %s18, 0
      %p122 = por %p120, %p121
      %p123 = scmp.ne.s32.totalorder %s115, %s117
      %p124 = scmp.eq.s32.totalorder %s23, 1
      %p125 = por %p123, %p124
      %p126 = scmp.ne.s32.totalorder %s117, %s118
      %p127 = scmp.eq.s32.totalorder %s23, 0
      %p128 = por %p126, %p127
      %p129 = scmp.ne.s32.totalorder %s117, %s118
      %p130 = scmp.eq.s32.totalorder %s24, 1
      %p131 = por %p129, %p130
      %p133 = scmp.ne.s32.totalorder %s118, %s132
      %p134 = scmp.eq.s32.totalorder %s24, 0
      %p135 = por %p133, %p134
      %s136 = ssub.s32 %s18, %s25
      %p137 = scmp.eq.s32.totalorder %s136, 0
      %s139 = sadd.s32 %s138, 1
      %s140 = scalar_select %p137, %s138, %s139
      %p143 = pneg %p137
      %p144 = scmp.eq.s32.totalorder %s18, 1
      %p145 = por %p143, %p144
      %p146 = scmp.ne.s32.totalorder %s138, %s141
      %p147 = scmp.eq.s32.totalorder %s18, 0
      %p148 = por %p146, %p147
      %p149 = scmp.ne.s32.totalorder %s138, %s141
      %p150 = scmp.eq.s32.totalorder %s23, 1
      %p151 = por %p149, %p150
      %p152 = scmp.ne.s32.totalorder %s141, %s142
      %p153 = scmp.eq.s32.totalorder %s23, 0
      %p154 = por %p152, %p153
      %p155 = scmp.ne.s32.totalorder %s141, %s142
      %p156 = scmp.eq.s32.totalorder %s24, 1
      %p157 = por %p155, %p156
      %p159 = scmp.ne.s32.totalorder %s142, %s158
      %p160 = scmp.eq.s32.totalorder %s24, 0
      %p161 = por %p159, %p160
      %p162 = scmp.le.s32.totalorder 1, %s18
      %p163 = scmp.lt.s32.totalorder %s18, 3
      %p164 = pnand %p162, %p163
      %p165 = pneg %p164
      // Predicated region
      $region9: #{tpu_custom_call.1} parent=5 // pred_check
        _
      $region10: #{tpu_custom_call.1} parent=5 // pred_check_branch
        %167 = sbr.rel (%p164) target = $region12
      $region11: #{tpu_custom_call.1} parent=5 // pred_region
        %s168 = ssub.s32 %s18, 1
        // Predicated region
        $region13: #{tpu_custom_call.1} parent=11 // pred_check
          %p169 = pneg %p65
        $region14: #{tpu_custom_call.1} parent=11 // pred_check_branch
          %171 = sbr.rel (%p169) target = $region16
        $region15: #{tpu_custom_call.1} parent=11 // pred_region
          %173 = vsyncadd [#allocation6], 0
          %s174 = sshll.u32 %s1, 4
          %s175 = int_to_ptr.hbm [resolvable:$true] %s174
          %s176 = sshll.u32 [#allocation5], 4
          %s177 = int_to_ptr.vmem [resolvable:$true] %s176
          %182 = dma.hbm_to_vmem [thread:$0]  %s175, 1024, %s177, [#allocation6], 64, 64, 4
        $region16: #{tpu_custom_call.1} parent=11 // pred_fallthru
          _
        // Predicated region
        $region17: #{tpu_custom_call.1} parent=11 // pred_check
          %p183 = pneg %p86
        $region18: #{tpu_custom_call.1} parent=11 // pred_check_branch
          %185 = sbr.rel (%p183) target = $region20
        $region19: #{tpu_custom_call.1} parent=11 // pred_region
          _
        $region20: #{tpu_custom_call.1} parent=11 // pred_fallthru
          _
        // Predicated region
        $region21: #{tpu_custom_call.1} parent=11 // pred_check
          %p186 = pneg %p107
        $region22: #{tpu_custom_call.1} parent=11 // pred_check_branch
          %188 = sbr.rel (%p186) target = $region24
        $region23: #{tpu_custom_call.1} parent=11 // pred_region
          %190 = vsyncadd [#allocation6], 0
          %s191 = sshll.u32 %s3, 4
          %s192 = int_to_ptr.hbm [resolvable:$true] %s191
          %s193 = sshll.u32 [#allocation7], 4
          %s194 = int_to_ptr.vmem [resolvable:$true] %s193
          %199 = dma.hbm_to_vmem [thread:$0]  %s192, 1024, %s194, [#allocation6], 64, 64, 4
        $region24: #{tpu_custom_call.1} parent=11 // pred_fallthru
          _
        // Predicated region
        $region25: #{tpu_custom_call.1} parent=11 // pred_check
          %p200 = pneg %p128
        $region26: #{tpu_custom_call.1} parent=11 // pred_check_branch
          %202 = sbr.rel (%p200) target = $region28
        $region27: #{tpu_custom_call.1} parent=11 // pred_region
          _
        $region28: #{tpu_custom_call.1} parent=11 // pred_fallthru
          _
      $region12: #{tpu_custom_call.1} parent=5 // pred_fallthru
        _
      %p203 = scmp.lt.s32.totalorder %s18, 2
      // Predicated region
      $region29: #{tpu_custom_call.1} parent=5 // pred_check
        %p204 = pneg %p203
      $region30: #{tpu_custom_call.1} parent=5 // pred_check_branch
        %206 = sbr.rel (%p204) target = $region32
      $region31: #{tpu_custom_call.1} parent=5 // pred_region
        // Predicated region
        $region33: #{tpu_custom_call.1} parent=31 // pred_check
          %p207 = pneg %p38
        $region34: #{tpu_custom_call.1} parent=31 // pred_check_branch
          %209 = sbr.rel (%p207) target = $region36
        $region35: #{tpu_custom_call.1} parent=31 // pred_region
          %s210 = sand.u32 %s28, 1
          %s211 = scalar_lea.sflag [#allocation3], %s210
          %s212 = sand.u32 %s28, 1
          %s213 = smul.addr %s212, 8
          %s214 = scalar_lea.vmem [#allocation2], %s213
          %s215 = smul.u32 2, %s18
          %217 = vsyncadd %s211, 0
          %s218 = smul.addr %s215, 4
          %s219 = scalar_lea.hbm %s0, %s218
          %s220 = sshll.u32 %s219, 4
          %s221 = int_to_ptr.hbm [resolvable:$true] %s220
          %s222 = sshll.u32 %s214, 4
          %s223 = int_to_ptr.vmem [resolvable:$true] %s222
          %228 = dma.hbm_to_vmem [thread:$0]  %s221, 128, %s223, %s211, 64, 64, 4
        $region36: #{tpu_custom_call.1} parent=31 // pred_fallthru
          _
      $region32: #{tpu_custom_call.1} parent=5 // pred_fallthru
        _
      %p229 = scmp.le.s32.totalorder 1, %s18
      %p230 = scmp.lt.s32.totalorder %s18, 3
      %p231 = pnand %p229, %p230
      %p232 = pneg %p231
      // Predicated region
      $region37: #{tpu_custom_call.1} parent=5 // pred_check
        _
      $region38: #{tpu_custom_call.1} parent=5 // pred_check_branch
        %234 = sbr.rel (%p231) target = $region40
      $region39: #{tpu_custom_call.1} parent=5 // pred_region
        %s235 = ssub.s32 %s18, 1
        %s236 = sand.u32 %s31, 1
        %s237 = scalar_lea.sflag [#allocation3], %s236
        %s238 = sand.u32 %s31, 1
        %s239 = smul.addr %s238, 8
        %s240 = scalar_lea.vmem [#allocation2], %s239
        // Predicated region
        $region41: #{tpu_custom_call.1} parent=39 // pred_check
          %p241 = pneg %p44
        $region42: #{tpu_custom_call.1} parent=39 // pred_check_branch
          %243 = sbr.rel (%p241) target = $region44
        $region43: #{tpu_custom_call.1} parent=39 // pred_region
          %245 = dma.done %s237, 128
        $region44: #{tpu_custom_call.1} parent=39 // pred_fallthru
          _
        // Predicated region
        $region45: #{tpu_custom_call.1} parent=39 // pred_check
          %p246 = pneg %p65
        $region46: #{tpu_custom_call.1} parent=39 // pred_check_branch
          %248 = sbr.rel (%p246) target = $region48
        $region47: #{tpu_custom_call.1} parent=39 // pred_region
          %250 = dma.done [#allocation6], 1024
        $region48: #{tpu_custom_call.1} parent=39 // pred_fallthru
          _
        // Predicated region
        $region49: #{tpu_custom_call.1} parent=39 // pred_check
          %p251 = pneg %p107
        $region50: #{tpu_custom_call.1} parent=39 // pred_check_branch
          %253 = sbr.rel (%p251) target = $region52
        $region51: #{tpu_custom_call.1} parent=39 // pred_region
          %255 = dma.done [#allocation6], 1024
        $region52: #{tpu_custom_call.1} parent=39 // pred_fallthru
          _
        %s256 = sand.u32 %s31, 1
        %s257 = scalar_lea.sflag [#allocation3], %s256
        %s258 = sand.u32 %s31, 1
        %s259 = smul.addr %s258, 8
        %s260 = scalar_lea.vmem [#allocation2], %s259
        %p261 = pneg %p44
        %p262 = pneg %p41
        %p263 = pneg %p65
        %p264 = pneg %p62
        %p265 = pneg %p86
        %p266 = pneg %p83
        %p267 = pneg %p107
        %p268 = pneg %p104
        %p269 = pneg %p128
        %p270 = pneg %p125
        %p271 = pneg %p154
        %p272 = pneg %p151
        %s273 = sand.u32 %s141, 1
        %s274 = scalar_lea.sflag [#allocation4], %s273
        %s275 = sand.u32 %s141, 1
        %s276 = smul.addr %s275, 16
        %s277 = scalar_lea.vmem [#allocation8], %s276
        %s278 = smul.u32 2, %s23
        %s279 = smul.u32 2, %s23
        %v280 = vld [vmem:[%s240] sm:$0xf]
        %v281 = vld [vmem:[%s240 + $0x4] sm:$0xf]
        %v282 = vld [vmem:[#allocation5] sm:$0xf]
        %v283 = vld [vmem:[#allocation5 + $0x4] sm:$0xf]
        %v284 = vld [vmem:[#allocation5 + $0x8] sm:$0xf]
        %v285 = vld [vmem:[#allocation5 + $0xc] sm:$0xf]
        %v286 = vld [vmem:[#allocation5 + $0x10] sm:$0xf]
        %v287 = vld [vmem:[#allocation5 + $0x14] sm:$0xf]
        %v288 = vld [vmem:[#allocation5 + $0x18] sm:$0xf]
        %v289 = vld [vmem:[#allocation5 + $0x1c] sm:$0xf]
        %v290 = vld [vmem:[#allocation5 + $0x20] sm:$0xf]
        %v291 = vld [vmem:[#allocation5 + $0x24] sm:$0xf]
        %v292 = vld [vmem:[#allocation5 + $0x28] sm:$0xf]
        %v293 = vld [vmem:[#allocation5 + $0x2c] sm:$0xf]
        %v294 = vld [vmem:[#allocation5 + $0x30] sm:$0xf]
        %v295 = vld [vmem:[#allocation5 + $0x34] sm:$0xf]
        %v296 = vld [vmem:[#allocation5 + $0x38] sm:$0xf]
        %v297 = vld [vmem:[#allocation5 + $0x3c] sm:$0xf]
        %v298 = vld [vmem:[%s2] sm:$0x1]
        %v300 = vperm.slane %v298, 0
        %v304 = vunpack.c.l.b16 %v280
        %v305 = vunpack.c.l.b16 %v281
        %v306 = vpack.c.b16 %v305, %v304
        %v324 = vunpack.c.l.b16 %v282
        %v325 = vunpack.c.l.b16 %v283
        %v326 = vunpack.c.l.b16 %v284
        %v327 = vunpack.c.l.b16 %v285
        %v328 = vunpack.c.l.b16 %v286
        %v329 = vunpack.c.l.b16 %v287
        %v330 = vunpack.c.l.b16 %v288
        %v331 = vunpack.c.l.b16 %v289
        %v332 = vunpack.c.l.b16 %v290
        %v333 = vunpack.c.l.b16 %v291
        %v334 = vunpack.c.l.b16 %v292
        %v335 = vunpack.c.l.b16 %v293
        %v336 = vunpack.c.l.b16 %v294
        %v337 = vunpack.c.l.b16 %v295
        %v338 = vunpack.c.l.b16 %v296
        %v339 = vunpack.c.l.b16 %v297
        %v340 = vpack.c.b16 %v325, %v324
        %v341 = vpack.c.b16 %v327, %v326
        %v342 = vpack.c.b16 %v329, %v328
        %v343 = vpack.c.b16 %v331, %v330
        %v344 = vpack.c.b16 %v333, %v332
        %v345 = vpack.c.b16 %v335, %v334
        %v346 = vpack.c.b16 %v337, %v336
        %v347 = vpack.c.b16 %v339, %v338
        %356 = vmatpush.bf16.msra.mxu0 %v347
        %357 = vmatpush.bf16.msra.mxu0 %v346
        %358 = vmatpush.bf16.msra.mxu0 %v345
        %359 = vmatpush.bf16.msra.mxu0 %v344
        %360 = vmatpush.bf16.msra.mxu0 %v343
        %361 = vmatpush.bf16.msra.mxu0 %v342
        %362 = vmatpush.bf16.msra.mxu0 %v341
        %363 = vmatpush.bf16.msra.mxu0 %v340
        %364 = vmatmul.bf16.gmra.mxu0 %v306
        %v365 = vpop.f32.mrf.mxu0
        %v366 = vadd.f32 %v300, %v365
        %v367 = vpop.f32.mrf.mxu0
        %v368 = vadd.f32 %v300, %v367
        %369 = vdwg.mxu0
        %v370 = vmax.f32 %v366, 0.0
        %v371 = vmax.f32 %v368, 0.0
        %v372 = vpack.c.bf16 %v371, %v370
        %v373 = vld [vmem:[#allocation7] sm:$0xf]
        %v374 = vld [vmem:[#allocation7 + $0x4] sm:$0xf]
        %v375 = vld [vmem:[#allocation7 + $0x8] sm:$0xf]
        %v376 = vld [vmem:[#allocation7 + $0xc] sm:$0xf]
        %v377 = vld [vmem:[#allocation7 + $0x10] sm:$0xf]
        %v378 = vld [vmem:[#allocation7 + $0x14] sm:$0xf]
        %v379 = vld [vmem:[#allocation7 + $0x18] sm:$0xf]
        %v380 = vld [vmem:[#allocation7 + $0x1c] sm:$0xf]
        %v381 = vld [vmem:[#allocation7 + $0x20] sm:$0xf]
        %v382 = vld [vmem:[#allocation7 + $0x24] sm:$0xf]
        %v383 = vld [vmem:[#allocation7 + $0x28] sm:$0xf]
        %v384 = vld [vmem:[#allocation7 + $0x2c] sm:$0xf]
        %v385 = vld [vmem:[#allocation7 + $0x30] sm:$0xf]
        %v386 = vld [vmem:[#allocation7 + $0x34] sm:$0xf]
        %v387 = vld [vmem:[#allocation7 + $0x38] sm:$0xf]
        %v388 = vld [vmem:[#allocation7 + $0x3c] sm:$0xf]
        %v389 = vld [vmem:[%s4] sm:$0x1]
        %v391 = vperm.slane %v389, 0
        %v409 = vunpack.c.l.b16 %v373
        %v410 = vunpack.c.l.b16 %v374
        %v411 = vunpack.c.l.b16 %v375
        %v412 = vunpack.c.l.b16 %v376
        %v413 = vunpack.c.l.b16 %v377
        %v414 = vunpack.c.l.b16 %v378
        %v415 = vunpack.c.l.b16 %v379
        %v416 = vunpack.c.l.b16 %v380
        %v417 = vunpack.c.l.b16 %v381
        %v418 = vunpack.c.l.b16 %v382
        %v419 = vunpack.c.l.b16 %v383
        %v420 = vunpack.c.l.b16 %v384
        %v421 = vunpack.c.l.b16 %v385
        %v422 = vunpack.c.l.b16 %v386
        %v423 = vunpack.c.l.b16 %v387
        %v424 = vunpack.c.l.b16 %v388
        %v425 = vpack.c.b16 %v410, %v409
        %v426 = vpack.c.b16 %v412, %v411
        %v427 = vpack.c.b16 %v414, %v413
        %v428 = vpack.c.b16 %v416, %v415
        %v429 = vpack.c.b16 %v418, %v417
        %v430 = vpack.c.b16 %v420, %v419
        %v431 = vpack.c.b16 %v422, %v421
        %v432 = vpack.c.b16 %v424, %v423
        %441 = vmatpush.bf16.msra.mxu0 %v432
        %442 = vmatpush.bf16.msra.mxu0 %v431
        %443 = vmatpush.bf16.msra.mxu0 %v430
        %444 = vmatpush.bf16.msra.mxu0 %v429
        %445 = vmatpush.bf16.msra.mxu0 %v428
        %446 = vmatpush.bf16.msra.mxu0 %v427
        %447 = vmatpush.bf16.msra.mxu0 %v426
        %448 = vmatpush.bf16.msra.mxu0 %v425
        %449 = vmatmul.bf16.gmra.mxu0 %v372
        %v450 = vpop.f32.mrf.mxu0
        %v451 = vadd.f32 %v391, %v450
        %v452 = vpop.f32.mrf.mxu0
        %v453 = vadd.f32 %v391, %v452
        %454 = vdwg.mxu0
        %455 = vst [vmem:[%s277] sm:$0xff] %v451
        %456 = vst [vmem:[%s277 + $0x8] sm:$0xff] %v453
        %s457 = sand.u32 %s141, 1
        %s458 = scalar_lea.sflag [#allocation4], %s457
        %s459 = sand.u32 %s141, 1
        %s460 = smul.addr %s459, 16
        %s461 = scalar_lea.vmem [#allocation8], %s460
        // Predicated region
        $region53: #{tpu_custom_call.1} parent=39 // pred_check
          %p462 = pneg %p151
        $region54: #{tpu_custom_call.1} parent=39 // pred_check_branch
          %464 = sbr.rel (%p462) target = $region56
        $region55: #{tpu_custom_call.1} parent=39 // pred_region
          %s465 = smul.u32 2, %s23
          %467 = vsyncadd %s458, 0
          %s468 = smul.addr %s465, 8
          %s469 = scalar_lea.hbm %s5, %s468
          %s470 = sshll.u32 %s461, 4
          %s471 = int_to_ptr.vmem [resolvable:$true] %s470
          %s472 = sshll.u32 %s469, 4
          %s473 = int_to_ptr.hbm [resolvable:$true] %s472
          %478 = dma.vmem_to_hbm [thread:$0]  %s471, 256, %s473, %s458, 128, 128, 8
        $region56: #{tpu_custom_call.1} parent=39 // pred_fallthru
          _
      $region40: #{tpu_custom_call.1} parent=5 // pred_fallthru
        _
      %p479 = scmp.le.s32.totalorder 2, %s18
      // Predicated region
      $region57: #{tpu_custom_call.1} parent=5 // pred_check
        %p480 = pneg %p479
      $region58: #{tpu_custom_call.1} parent=5 // pred_check_branch
        %482 = sbr.rel (%p480) target = $region60
      $region59: #{tpu_custom_call.1} parent=5 // pred_region
        %s483 = ssub.s32 %s18, 2
        // Predicated region
        $region61: #{tpu_custom_call.1} parent=59 // pred_check
          %p484 = pneg %p157
        $region62: #{tpu_custom_call.1} parent=59 // pred_check_branch
          %486 = sbr.rel (%p484) target = $region64
        $region63: #{tpu_custom_call.1} parent=59 // pred_region
          %s487 = sand.u32 %s142, 1
          %s488 = scalar_lea.sflag [#allocation4], %s487
          %s489 = sand.u32 %s142, 1
          %s490 = smul.addr %s489, 16
          %s491 = scalar_lea.vmem [#allocation8], %s490
          %493 = dma.done %s488, 256
        $region64: #{tpu_custom_call.1} parent=59 // pred_fallthru
          _
      $region60: #{tpu_custom_call.1} parent=5 // pred_fallthru
        _
    $region6: #{tpu_custom_call.1} parent=1 // loop_footer
      %s22 = sadd.s32 1, %s18
    $region7: #{tpu_custom_call.1} parent=1 // loop_footer_branch
      %17 = sbr.rel target = $region3
    $region8: #{tpu_custom_call.1} parent=1 // loop_exit
      _
    %494 = vsyncpa [#allocation3], 1
    %s495 = scalar_lea.sflag [#allocation3], 1
    %496 = vsyncpa %s495, 1
    %497 = vsyncpa [#allocation6], 1
    %498 = vsyncpa [#allocation4], 1
    %s499 = scalar_lea.sflag [#allocation4], 1
    %500 = vsyncpa %s499, 1

</llo_original>
